<compile_context>
chip_gen: v7x
topology: tpu7x:2x2x1
jax: 0.10.0
libtpu: 0.0.40
codegen_flags: <defaults>
</compile_context>

<pallas_src>
import jax
import jax.numpy as jnp
from jax.experimental import pallas as pl
from jax.experimental.pallas import tpu as pltpu


# ---------------------------------------------------------------------------
# Kernel: fused (folded shared trunk) + policy head + value head.
# ---------------------------------------------------------------------------
def mlp_extractor_kernel(x_ref, wsh_ref, bsh_ref,
                         wp1_ref, bp1_ref, wp2_ref, bp2_ref, wp3_ref, bp3_ref,
                         wv1_ref, bv1_ref, wv2_ref, bv2_ref,
                         pi_ref, vf_ref):
    """x_ref: (TN, L) f32; weights pre-transposed to (in, out); biases (1, out).

    wsh_ref/bsh_ref are the exact fold of Conv1d(k=3,Cin=1) + Flatten + Linear.
    Outputs: pi_ref (TN, pi_dim) after sigmoid, vf_ref (TN, vf_dim).
    """
    x = x_ref[...]

    # Shared trunk: folded conv+flatten+linear, then ReLU.  Single MXU matmul.
    h = jnp.dot(x, wsh_ref[...], preferred_element_type=jnp.float32) + bsh_ref[...]
    h = jnp.maximum(h, 0.0)

    # Policy head.
    p = jnp.dot(h, wp1_ref[...], preferred_element_type=jnp.float32) + bp1_ref[...]
    p = jnp.maximum(p, 0.0)
    p = jnp.dot(p, wp2_ref[...], preferred_element_type=jnp.float32) + bp2_ref[...]
    p = jnp.maximum(p, 0.0)
    p = jnp.dot(p, wp3_ref[...], preferred_element_type=jnp.float32) + bp3_ref[...]
    pi_ref[...] = 1.0 / (1.0 + jnp.exp(-p))          # sigmoid (exp goes to the EUP slot)

    # Value head.
    v = jnp.dot(h, wv1_ref[...], preferred_element_type=jnp.float32) + bv1_ref[...]
    v = jnp.maximum(v, 0.0)
    vf_ref[...] = jnp.dot(v, wv2_ref[...], preferred_element_type=jnp.float32) + bv2_ref[...]


# ---------------------------------------------------------------------------
# One-time parameter preparation (hoisted off the per-forward hot path).
# ---------------------------------------------------------------------------
def fold_shared_params(wconv, bconv, wlin, blin):
    """Exact fold of Conv1d(k=3, Cin=1) + Flatten + Linear into (Wfold (L,S), b_eff (S,)).

    shared[n,s] = sum_{c,l,k} wlin[s, c*Lout+l] * wconv[c,0,k] * x[n, l+k]
                + sum_{c,l}   wlin[s, c*Lout+l] * bconv[c] + blin[s]
    => Wfold[j, s] = sum over (c,l,k) with l+k == j of wlin[s,c*Lout+l]*wconv[c,0,k]
    """
    C, Cin, K = wconv.shape
    assert Cin == 1, "unsqueeze(1) in the PyTorch forward implies Conv1d in_channels == 1"
    S = blin.shape[0]
    Lout = wlin.shape[1] // C
    L = Lout + K - 1

    wc = wconv[:, 0, :].astype(jnp.float32)                  # (C, K)
    wlin3 = wlin.reshape(S, C, Lout).astype(jnp.float32)     # (S, C, Lout)

    wfold = jnp.zeros((L, S), jnp.float32)
    for k in range(K):
        wfold = wfold.at[k:k + Lout, :].add(jnp.einsum('scl,c->ls', wlin3, wc[:, k]))
    b_eff = blin.astype(jnp.float32) + jnp.einsum('scl,c->s', wlin3, bconv.astype(jnp.float32))
    return wfold, b_eff


def prepare_params(params):
    """Re-layout once per parameter set: fold the shared net, transpose Linear weights to
    (in, out), reshape biases to (1, out). Call at init time, not per forward."""
    wfold, b_eff = fold_shared_params(params['wconv'], params['bconv'],
                                      params['wlin'], params['blin'])
    t = lambda w: jnp.asarray(w, jnp.float32).T
    r = lambda b: jnp.asarray(b, jnp.float32).reshape(1, -1)
    return dict(
        wsh=wfold, bsh=b_eff.reshape(1, -1),
        wp1=t(params['wp1']), bp1=r(params['bp1']),
        wp2=t(params['wp2']), bp2=r(params['bp2']),
        wp3=t(params['wp3']), bp3=r(params['bp3']),
        wv1=t(params['wv1']), bv1=r(params['bv1']),
        wv2=t(params['wv2']), bv2=r(params['bv2']),
    )


# ---------------------------------------------------------------------------
# Forward wrapper: grid over N, weights resident via constant index_maps.
# ---------------------------------------------------------------------------
def mlp_extractor_forward(x, kp, *, block_n=256):
    N, L = x.shape
    S = kp['wsh'].shape[1]
    P = kp['wp3'].shape[1]
    V = kp['wv2'].shape[1]

    # Batch tile: full batch if small, else 256 rows (multiple of 8 sublanes / 128 MXU rows,
    # well under the 32 MiB default scoped VMEM on v6e/v7x and 16 MiB on v5e).
    tn = N if N <= block_n else block_n
    grid = (pl.cdiv(N, tn),)

    row_spec = lambda c: pl.BlockSpec((tn, c), lambda i: (i, 0))
    full_spec = lambda a: pl.BlockSpec(a.shape, lambda i: (0, 0))   # resident across grid

    weights = [kp['wsh'], kp['bsh'],
               kp['wp1'], kp['bp1'], kp['wp2'], kp['bp2'], kp['wp3'], kp['bp3'],
               kp['wv1'], kp['bv1'], kp['wv2'], kp['bv2']]

    flops = 2 * N * (L * S + S * 64 + 64 * 32 + 32 * P + S * 32 + 32 * V)
    w_bytes = sum(int(w.size) for w in weights) * 4
    cost = pl.CostEstimate(flops=flops,
                           transcendentals=N * P,
                           bytes_accessed=w_bytes + 4 * N * (L + P + V))

    return pl.pallas_call(
        mlp_extractor_kernel,
        out_shape=(jax.ShapeDtypeStruct((N, P), jnp.float32),
                   jax.ShapeDtypeStruct((N, V), jnp.float32)),
        grid=grid,
        in_specs=[row_spec(L)] + [full_spec(w) for w in weights],
        out_specs=(row_spec(P), row_spec(V)),
        compiler_params=pltpu.CompilerParams(
            dimension_semantics=("parallel",),          # shards N across TCs on v7x
            vmem_limit_bytes=32 * 1024 * 1024),
        cost_estimate=cost,
    )(x, *weights)


# ---------------------------------------------------------------------------
# Pure-JAX reference matching the PyTorch MLPExtractor semantics exactly.
# ---------------------------------------------------------------------------
def reference_forward(x, p):
    wconv, bconv, wlin, blin = p['wconv'], p['bconv'], p['wlin'], p['blin']
    N, L = x.shape
    C, _, K = wconv.shape
    Lout = L - K + 1
    patches = jnp.stack([x[:, k:k + Lout] for k in range(K)], axis=-1)        # (N, Lout, K)
    y = jnp.einsum('nlk,ck->ncl', patches, wconv[:, 0, :]) + bconv[None, :, None]
    shared = jnp.maximum(y.reshape(N, C * Lout) @ wlin.T + blin, 0.0)

    h = jnp.maximum(shared @ p['wp1'].T + p['bp1'], 0.0)
    h = jnp.maximum(h @ p['wp2'].T + p['bp2'], 0.0)
    pi = jax.nn.sigmoid(h @ p['wp3'].T + p['bp3'])

    v = jnp.maximum(shared @ p['wv1'].T + p['bv1'], 0.0)
    vf = v @ p['wv2'].T + p['bv2']
    return pi, vf


if __name__ == "__main__":
    # MLPExtractor(input_dim=1, mask_length=16, shared=128, pi=2, vf=1)
    mask_length = 16
    shared_dim = 128
    pi_dim, vf_dim = 2, 1
    conv_out, k_size = 128, 3
    Lout = mask_length - k_size + 1
    batch = 2

    key = jax.random.PRNGKey(0)
    ks = jax.random.split(key, 16)

    # Deterministic synthetic parameters in PyTorch layouts.
    params = dict(
        wconv=0.1 * jax.random.normal(ks[0], (conv_out, 1, k_size), jnp.float32),
        bconv=0.1 * jax.random.normal(ks[1], (conv_out,), jnp.float32),
        wlin=0.05 * jax.random.normal(ks[2], (shared_dim, conv_out * Lout), jnp.float32),
        blin=0.05 * jax.random.normal(ks[3], (shared_dim,), jnp.float32),
        wp1=0.1 * jax.random.normal(ks[4], (64, shared_dim), jnp.float32),
        bp1=0.1 * jax.random.normal(ks[5], (64,), jnp.float32),
        wp2=0.1 * jax.random.normal(ks[6], (32, 64), jnp.float32),
        bp2=0.1 * jax.random.normal(ks[7], (32,), jnp.float32),
        wp3=0.1 * jax.random.normal(ks[8], (pi_dim, 32), jnp.float32),
        bp3=0.1 * jax.random.normal(ks[9], (pi_dim,), jnp.float32),
        wv1=0.1 * jax.random.normal(ks[10], (32, shared_dim), jnp.float32),
        bv1=0.1 * jax.random.normal(ks[11], (32,), jnp.float32),
        wv2=0.1 * jax.random.normal(ks[12], (vf_dim, 32), jnp.float32),
        bv2=0.1 * jax.random.normal(ks[13], (vf_dim,), jnp.float32),
    )

    # One-time fold/re-layout (hoisted off the per-forward path).
    kernel_params = jax.block_until_ready(prepare_params(params))

    # Small-batch check (batch=2, as implied by the module usage).
    x = jax.random.normal(ks[14], (batch, mask_length), jnp.float32)
    pi_out, vf_out = jax.block_until_ready(mlp_extractor_forward(x, kernel_params))
    pi_ref, vf_ref = jax.block_until_ready(reference_forward(x, params))
    assert pi_out.shape == (batch, pi_dim) and vf_out.shape == (batch, vf_dim)
    assert jnp.allclose(pi_out, pi_ref, rtol=1e-2, atol=1e-2), "policy mismatch vs. reference"
    assert jnp.allclose(vf_out, vf_ref, rtol=1e-2, atol=1e-2), "value mismatch vs. reference"

    # Larger batch exercising the N-grid (including a partial edge tile).
    xb = jax.random.normal(ks[15], (384, mask_length), jnp.float32)
    pi_b, vf_b = jax.block_until_ready(mlp_extractor_forward(xb, kernel_params))
    pi_rb, vf_rb = jax.block_until_ready(reference_forward(xb, params))
    assert jnp.allclose(pi_b, pi_rb, rtol=1e-2, atol=1e-2), "policy mismatch (gridded) vs. reference"
    assert jnp.allclose(vf_b, vf_rb, rtol=1e-2, atol=1e-2), "value mismatch (gridded) vs. reference"

    print("KERNEL_OK")
</pallas_src>

<mosaic_0001>
module attributes {stable_mosaic.version = 11 : i64} {
  func.func @mlp_extractor_kernel(%arg0: i32, %arg1: memref<2x16xf32, #tpu.memory_space<vmem>>, %arg2: memref<16x128xf32, #tpu.memory_space<vmem>>, %arg3: memref<1x128xf32, #tpu.memory_space<vmem>>, %arg4: memref<128x64xf32, #tpu.memory_space<vmem>>, %arg5: memref<1x64xf32, #tpu.memory_space<vmem>>, %arg6: memref<64x32xf32, #tpu.memory_space<vmem>>, %arg7: memref<1x32xf32, #tpu.memory_space<vmem>>, %arg8: memref<32x2xf32, #tpu.memory_space<vmem>>, %arg9: memref<1x2xf32, #tpu.memory_space<vmem>>, %arg10: memref<128x32xf32, #tpu.memory_space<vmem>>, %arg11: memref<1x32xf32, #tpu.memory_space<vmem>>, %arg12: memref<32x1xf32, #tpu.memory_space<vmem>>, %arg13: memref<1x1xf32, #tpu.memory_space<vmem>>, %arg14: memref<2x2xf32, #tpu.memory_space<vmem>>, %arg15: memref<2x1xf32, #tpu.memory_space<vmem>>) attributes {dimension_semantics = [#tpu.dimension_semantics<parallel>], iteration_bounds = array<i64: 1>, scalar_prefetch = 0 : i64, scratch_operands = 0 : i64, tpu.core_type = #tpu.core_type<tc>, window_params = [{transform_indices = @transform_0, window_bounds = array<i64: 2, 16>}, {pipeline_mode = #tpu.pipeline_mode<synchronous>, transform_indices = @transform_1, window_bounds = array<i64: 16, 128>}, {pipeline_mode = #tpu.pipeline_mode<synchronous>, transform_indices = @transform_2, window_bounds = array<i64: 1, 128>}, {pipeline_mode = #tpu.pipeline_mode<synchronous>, transform_indices = @transform_3, window_bounds = array<i64: 128, 64>}, {pipeline_mode = #tpu.pipeline_mode<synchronous>, transform_indices = @transform_4, window_bounds = array<i64: 1, 64>}, {pipeline_mode = #tpu.pipeline_mode<synchronous>, transform_indices = @transform_5, window_bounds = array<i64: 64, 32>}, {pipeline_mode = #tpu.pipeline_mode<synchronous>, transform_indices = @transform_6, window_bounds = array<i64: 1, 32>}, {pipeline_mode = #tpu.pipeline_mode<synchronous>, transform_indices = @transform_7, window_bounds = array<i64: 32, 2>}, {pipeline_mode = #tpu.pipeline_mode<synchronous>, transform_indices = @transform_8, window_bounds = array<i64: 1, 2>}, {pipeline_mode = #tpu.pipeline_mode<synchronous>, transform_indices = @transform_9, window_bounds = array<i64: 128, 32>}, {pipeline_mode = #tpu.pipeline_mode<synchronous>, transform_indices = @transform_10, window_bounds = array<i64: 1, 32>}, {pipeline_mode = #tpu.pipeline_mode<synchronous>, transform_indices = @transform_11, window_bounds = array<i64: 32, 1>}, {pipeline_mode = #tpu.pipeline_mode<synchronous>, transform_indices = @transform_12, window_bounds = array<i64: 1, 1>}, {transform_indices = @transform_13, window_bounds = array<i64: 2, 2>}, {transform_indices = @transform_14, window_bounds = array<i64: 2, 1>}]} {
    %c0 = arith.constant 0 : index
    %c0_0 = arith.constant 0 : index
    %0 = vector.load %arg1[%c0, %c0_0] : memref<2x16xf32, #tpu.memory_space<vmem>>, vector<2x16xf32>
    %c0_1 = arith.constant 0 : index
    %c0_2 = arith.constant 0 : index
    %1 = vector.load %arg2[%c0_1, %c0_2] : memref<16x128xf32, #tpu.memory_space<vmem>>, vector<16x128xf32>
    %cst = arith.constant dense<0.000000e+00> : vector<2x128xf32>
    %2 = tpu.matmul %0, %1, %cst {dimension_numbers = #tpu.dot_dimension_numbers<[1], [0], [0], [1], [0, 0, 1, 1], [], []>} : vector<2x16xf32>, vector<16x128xf32>, vector<2x128xf32> -> vector<2x128xf32>
    %c0_3 = arith.constant 0 : index
    %c0_4 = arith.constant 0 : index
    %3 = vector.load %arg3[%c0_3, %c0_4] : memref<1x128xf32, #tpu.memory_space<vmem>>, vector<1x128xf32>
    %4 = vector.broadcast %3 : vector<1x128xf32> to vector<2x128xf32>
    %5 = arith.addf %2, %4 : vector<2x128xf32>
    %cst_5 = arith.constant 0.000000e+00 : f32
    %6 = vector.broadcast %cst_5 : f32 to vector<2x128xf32>
    %7 = arith.maximumf %5, %6 : vector<2x128xf32>
    %c0_6 = arith.constant 0 : index
    %c0_7 = arith.constant 0 : index
    %8 = vector.load %arg4[%c0_6, %c0_7] : memref<128x64xf32, #tpu.memory_space<vmem>>, vector<128x64xf32>
    %cst_8 = arith.constant dense<0.000000e+00> : vector<2x64xf32>
    %9 = tpu.matmul %7, %8, %cst_8 {dimension_numbers = #tpu.dot_dimension_numbers<[1], [0], [0], [1], [0, 0, 1, 1], [], []>} : vector<2x128xf32>, vector<128x64xf32>, vector<2x64xf32> -> vector<2x64xf32>
    %c0_9 = arith.constant 0 : index
    %c0_10 = arith.constant 0 : index
    %10 = vector.load %arg5[%c0_9, %c0_10] : memref<1x64xf32, #tpu.memory_space<vmem>>, vector<1x64xf32>
    %11 = vector.broadcast %10 : vector<1x64xf32> to vector<2x64xf32>
    %12 = arith.addf %9, %11 : vector<2x64xf32>
    %cst_11 = arith.constant 0.000000e+00 : f32
    %13 = vector.broadcast %cst_11 : f32 to vector<2x64xf32>
    %14 = arith.maximumf %12, %13 : vector<2x64xf32>
    %c0_12 = arith.constant 0 : index
    %c0_13 = arith.constant 0 : index
    %15 = vector.load %arg6[%c0_12, %c0_13] : memref<64x32xf32, #tpu.memory_space<vmem>>, vector<64x32xf32>
    %cst_14 = arith.constant dense<0.000000e+00> : vector<2x32xf32>
    %16 = tpu.matmul %14, %15, %cst_14 {dimension_numbers = #tpu.dot_dimension_numbers<[1], [0], [0], [1], [0, 0, 1, 1], [], []>} : vector<2x64xf32>, vector<64x32xf32>, vector<2x32xf32> -> vector<2x32xf32>
    %c0_15 = arith.constant 0 : index
    %c0_16 = arith.constant 0 : index
    %17 = vector.load %arg7[%c0_15, %c0_16] : memref<1x32xf32, #tpu.memory_space<vmem>>, vector<1x32xf32>
    %18 = vector.broadcast %17 : vector<1x32xf32> to vector<2x32xf32>
    %19 = arith.addf %16, %18 : vector<2x32xf32>
    %cst_17 = arith.constant 0.000000e+00 : f32
    %20 = vector.broadcast %cst_17 : f32 to vector<2x32xf32>
    %21 = arith.maximumf %19, %20 : vector<2x32xf32>
    %c0_18 = arith.constant 0 : index
    %c0_19 = arith.constant 0 : index
    %22 = vector.load %arg8[%c0_18, %c0_19] : memref<32x2xf32, #tpu.memory_space<vmem>>, vector<32x2xf32>
    %cst_20 = arith.constant dense<0.000000e+00> : vector<2x2xf32>
    %23 = tpu.matmul %21, %22, %cst_20 {dimension_numbers = #tpu.dot_dimension_numbers<[1], [0], [0], [1], [0, 0, 1, 1], [], []>} : vector<2x32xf32>, vector<32x2xf32>, vector<2x2xf32> -> vector<2x2xf32>
    %c0_21 = arith.constant 0 : index
    %c0_22 = arith.constant 0 : index
    %24 = vector.load %arg9[%c0_21, %c0_22] : memref<1x2xf32, #tpu.memory_space<vmem>>, vector<1x2xf32>
    %25 = vector.broadcast %24 : vector<1x2xf32> to vector<2x2xf32>
    %26 = arith.addf %23, %25 : vector<2x2xf32>
    %cst_23 = arith.constant 0.000000e+00 : f32
    %27 = vector.broadcast %cst_23 : f32 to vector<2x2xf32>
    %28 = arith.subf %27, %26 : vector<2x2xf32>
    %29 = math.exp %28 : vector<2x2xf32>
    %cst_24 = arith.constant 1.000000e+00 : f32
    %30 = vector.broadcast %cst_24 : f32 to vector<2x2xf32>
    %31 = arith.addf %30, %29 : vector<2x2xf32>
    %cst_25 = arith.constant 1.000000e+00 : f32
    %32 = vector.broadcast %cst_25 : f32 to vector<2x2xf32>
    %33 = arith.divf %32, %31 : vector<2x2xf32>
    %c0_26 = arith.constant 0 : index
    %c0_27 = arith.constant 0 : index
    %34 = vector.load %arg14[%c0_26, %c0_27] : memref<2x2xf32, #tpu.memory_space<vmem>>, vector<2x2xf32>
    tpu.vector_store %arg14[%c0_26, %c0_27], %33 {strides = array<i32>} : memref<2x2xf32, #tpu.memory_space<vmem>>, vector<2x2xf32>,
    %c0_28 = arith.constant 0 : index
    %c0_29 = arith.constant 0 : index
    %35 = vector.load %arg10[%c0_28, %c0_29] : memref<128x32xf32, #tpu.memory_space<vmem>>, vector<128x32xf32>
    %cst_30 = arith.constant dense<0.000000e+00> : vector<2x32xf32>
    %36 = tpu.matmul %7, %35, %cst_30 {dimension_numbers = #tpu.dot_dimension_numbers<[1], [0], [0], [1], [0, 0, 1, 1], [], []>} : vector<2x128xf32>, vector<128x32xf32>, vector<2x32xf32> -> vector<2x32xf32>
    %c0_31 = arith.constant 0 : index
    %c0_32 = arith.constant 0 : index
    %37 = vector.load %arg11[%c0_31, %c0_32] : memref<1x32xf32, #tpu.memory_space<vmem>>, vector<1x32xf32>
    %38 = vector.broadcast %37 : vector<1x32xf32> to vector<2x32xf32>
    %39 = arith.addf %36, %38 : vector<2x32xf32>
    %cst_33 = arith.constant 0.000000e+00 : f32
    %40 = vector.broadcast %cst_33 : f32 to vector<2x32xf32>
    %41 = arith.maximumf %39, %40 : vector<2x32xf32>
    %c0_34 = arith.constant 0 : index
    %c0_35 = arith.constant 0 : index
    %42 = vector.load %arg12[%c0_34, %c0_35] : memref<32x1xf32, #tpu.memory_space<vmem>>, vector<32x1xf32>
    %cst_36 = arith.constant dense<0.000000e+00> : vector<2x1xf32>
    %43 = tpu.matmul %41, %42, %cst_36 {dimension_numbers = #tpu.dot_dimension_numbers<[1], [0], [0], [1], [0, 0, 1, 1], [], []>} : vector<2x32xf32>, vector<32x1xf32>, vector<2x1xf32> -> vector<2x1xf32>
    %c0_37 = arith.constant 0 : index
    %c0_38 = arith.constant 0 : index
    %44 = vector.load %arg13[%c0_37, %c0_38] : memref<1x1xf32, #tpu.memory_space<vmem>>, vector<1x1xf32>
    %45 = vector.broadcast %44 : vector<1x1xf32> to vector<2x1xf32>
    %46 = arith.addf %43, %45 : vector<2x1xf32>
    %c0_39 = arith.constant 0 : index
    %c0_40 = arith.constant 0 : index
    %47 = vector.load %arg15[%c0_39, %c0_40] : memref<2x1xf32, #tpu.memory_space<vmem>>, vector<2x1xf32>
    tpu.vector_store %arg15[%c0_39, %c0_40], %46 {strides = array<i32>} : memref<2x1xf32, #tpu.memory_space<vmem>>, vector<2x1xf32>,
    return
  }
  func.func @transform_0(%arg0: i32) -> (i32, i32) {
    %c0_i32 = arith.constant 0 : i32
    %c0_i32_0 = arith.constant 0 : i32
    return %arg0, %c0_i32 : i32, i32
  }
  func.func @transform_1(%arg0: i32) -> (i32, i32) {
    %c0_i32 = arith.constant 0 : i32
    %c0_i32_0 = arith.constant 0 : i32
    %c0_i32_1 = arith.constant 0 : i32
    return %c0_i32, %c0_i32_0 : i32, i32
  }
  func.func @transform_2(%arg0: i32) -> (i32, i32) {
    %c0_i32 = arith.constant 0 : i32
    %c0_i32_0 = arith.constant 0 : i32
    %c0_i32_1 = arith.constant 0 : i32
    return %c0_i32, %c0_i32_0 : i32, i32
  }
  func.func @transform_3(%arg0: i32) -> (i32, i32) {
    %c0_i32 = arith.constant 0 : i32
    %c0_i32_0 = arith.constant 0 : i32
    %c0_i32_1 = arith.constant 0 : i32
    return %c0_i32, %c0_i32_0 : i32, i32
  }
  func.func @transform_4(%arg0: i32) -> (i32, i32) {
    %c0_i32 = arith.constant 0 : i32
    %c0_i32_0 = arith.constant 0 : i32
    %c0_i32_1 = arith.constant 0 : i32
    return %c0_i32, %c0_i32_0 : i32, i32
  }
  func.func @transform_5(%arg0: i32) -> (i32, i32) {
    %c0_i32 = arith.constant 0 : i32
    %c0_i32_0 = arith.constant 0 : i32
    %c0_i32_1 = arith.constant 0 : i32
    return %c0_i32, %c0_i32_0 : i32, i32
  }
  func.func @transform_6(%arg0: i32) -> (i32, i32) {
    %c0_i32 = arith.constant 0 : i32
    %c0_i32_0 = arith.constant 0 : i32
    %c0_i32_1 = arith.constant 0 : i32
    return %c0_i32, %c0_i32_0 : i32, i32
  }
  func.func @transform_7(%arg0: i32) -> (i32, i32) {
    %c0_i32 = arith.constant 0 : i32
    %c0_i32_0 = arith.constant 0 : i32
    %c0_i32_1 = arith.constant 0 : i32
    return %c0_i32, %c0_i32_0 : i32, i32
  }
  func.func @transform_8(%arg0: i32) -> (i32, i32) {
    %c0_i32 = arith.constant 0 : i32
    %c0_i32_0 = arith.constant 0 : i32
    %c0_i32_1 = arith.constant 0 : i32
    return %c0_i32, %c0_i32_0 : i32, i32
  }
  func.func @transform_9(%arg0: i32) -> (i32, i32) {
    %c0_i32 = arith.constant 0 : i32
    %c0_i32_0 = arith.constant 0 : i32
    %c0_i32_1 = arith.constant 0 : i32
    return %c0_i32, %c0_i32_0 : i32, i32
  }
  func.func @transform_10(%arg0: i32) -> (i32, i32) {
    %c0_i32 = arith.constant 0 : i32
    %c0_i32_0 = arith.constant 0 : i32
    %c0_i32_1 = arith.constant 0 : i32
    return %c0_i32, %c0_i32_0 : i32, i32
  }
  func.func @transform_11(%arg0: i32) -> (i32, i32) {
    %c0_i32 = arith.constant 0 : i32
    %c0_i32_0 = arith.constant 0 : i32
    %c0_i32_1 = arith.constant 0 : i32
    return %c0_i32, %c0_i32_0 : i32, i32
  }
  func.func @transform_12(%arg0: i32) -> (i32, i32) {
    %c0_i32 = arith.constant 0 : i32
    %c0_i32_0 = arith.constant 0 : i32
    %c0_i32_1 = arith.constant 0 : i32
    return %c0_i32, %c0_i32_0 : i32, i32
  }
  func.func @transform_13(%arg0: i32) -> (i32, i32) {
    %c0_i32 = arith.constant 0 : i32
    %c0_i32_0 = arith.constant 0 : i32
    return %arg0, %c0_i32 : i32, i32
  }
  func.func @transform_14(%arg0: i32) -> (i32, i32) {
    %c0_i32 = arith.constant 0 : i32
    %c0_i32_0 = arith.constant 0 : i32
    return %arg0, %c0_i32 : i32, i32
  }
}

</mosaic_0001>

<llo_original>
// kernel: tpu_custom_call.1
$region0: #{tpu_custom_call.1}
  #allocation0 [shape = 'u32[]', space=smem, size = 0x4, offset = 0x4, fixed_abs, tag = 'smem constant byte address 0x4 - core index']
  #allocation1 [shape = 'u32[144,128]{1,0:T(1,128)}', space=vmem, size = 0x12000, scoped, tag = 'internal scratch']
  #allocation2 [shape = 'f32[1,1]{1,0:T(1,128)S(1)}', space=vmem, size = 0x200, scoped, tag = 'scoped memory for tpu_custom_call.1']
  %s0 = inlined_call_operand.vmem [shape: f32[2,16], index: 0, kind: input, shape index: {}]
  %s1 = inlined_call_operand.vmem [shape: f32[16,128], index: 1, kind: input, shape index: {}]
  %s2 = inlined_call_operand.vmem [shape: f32[1,128], index: 2, kind: input, shape index: {}]
  %s3 = inlined_call_operand.vmem [shape: f32[128,64], index: 3, kind: input, shape index: {}]
  %s4 = inlined_call_operand.vmem [shape: f32[1,64], index: 4, kind: input, shape index: {}]
  %s5 = inlined_call_operand.vmem [shape: f32[64,32], index: 5, kind: input, shape index: {}]
  %s6 = inlined_call_operand.vmem [shape: f32[1,32], index: 6, kind: input, shape index: {}]
  %s7 = inlined_call_operand.vmem [shape: f32[32,2], index: 7, kind: input, shape index: {}]
  %s8 = inlined_call_operand.vmem [shape: f32[1,2], index: 8, kind: input, shape index: {}]
  %s9 = inlined_call_operand.vmem [shape: f32[128,32], index: 9, kind: input, shape index: {}]
  %s10 = inlined_call_operand.vmem [shape: f32[1,32], index: 10, kind: input, shape index: {}]
  %s11 = inlined_call_operand.vmem [shape: f32[32,1], index: 11, kind: input, shape index: {}]
  %s12 = inlined_call_operand.<no memory space> [shape: f32[1,1], index: 12, kind: input, shape index: {}]
  %s13 = inlined_call_operand.hbm [shape: f32[2,2], index: 13, kind: output, shape index: {0}]
  %s14 = inlined_call_operand.vmem [shape: f32[2,1], index: 14, kind: output, shape index: {1}]
  %15 = xla_tuple %s13, %s14
  %s16 = sld [smem:[#allocation0]]
  $region70: #{tpu_custom_call.1} parent=0
    _
  %s18 = ssub.s32 1, %s16
  %s19 = scalar_select 0, %s18, %s16
  %v20 = vstv %s12
  %21 = vst [vmem:[#allocation2] sm:$0x1] %v20
  $region1: #{tpu_custom_call.1} parent=0
    #allocation3 [shape = 'u8[1024]{0}', space=vmem, size = 0x400, scoped, tag = 'output window, operand 0, single buffered']
    #allocation4 [shape = 's32[1]{0}', space=sflag, size = 0x4, scoped, tag = 'scoped memory for tpu_custom_call.1']
    %22 = vsyncpa [#allocation4], 0
    // Predicated region
    $region2: #{tpu_custom_call.1} parent=1 // pred_check
      _
    $region3: #{tpu_custom_call.1} parent=1 // pred_check_branch
      %24 = sbr.rel (0) target = $region5
    $region4: #{tpu_custom_call.1} parent=1 // pred_region
      _
    $region5: #{tpu_custom_call.1} parent=1 // pred_fallthru
      _
    // Predicated region
    $region6: #{tpu_custom_call.1} parent=1 // pred_check
      _
    $region7: #{tpu_custom_call.1} parent=1 // pred_check_branch
      %26 = sbr.rel (0) target = $region9
    $region8: #{tpu_custom_call.1} parent=1 // pred_region
      _
    $region9: #{tpu_custom_call.1} parent=1 // pred_fallthru
      _
    // Predicated region
    $region10: #{tpu_custom_call.1} parent=1 // pred_check
      _
    $region11: #{tpu_custom_call.1} parent=1 // pred_check_branch
      %28 = sbr.rel (0) target = $region13
    $region12: #{tpu_custom_call.1} parent=1 // pred_region
      _
    $region13: #{tpu_custom_call.1} parent=1 // pred_fallthru
      _
    // Predicated region
    $region14: #{tpu_custom_call.1} parent=1 // pred_check
      _
    $region15: #{tpu_custom_call.1} parent=1 // pred_check_branch
      %30 = sbr.rel (0) target = $region17
    $region16: #{tpu_custom_call.1} parent=1 // pred_region
      _
    $region17: #{tpu_custom_call.1} parent=1 // pred_fallthru
      _
    // Predicated region
    $region18: #{tpu_custom_call.1} parent=1 // pred_check
      _
    $region19: #{tpu_custom_call.1} parent=1 // pred_check_branch
      %32 = sbr.rel (0) target = $region21
    $region20: #{tpu_custom_call.1} parent=1 // pred_region
      _
    $region21: #{tpu_custom_call.1} parent=1 // pred_fallthru
      _
    // Predicated region
    $region22: #{tpu_custom_call.1} parent=1 // pred_check
      _
    $region23: #{tpu_custom_call.1} parent=1 // pred_check_branch
      %34 = sbr.rel (0) target = $region25
    $region24: #{tpu_custom_call.1} parent=1 // pred_region
      _
    $region25: #{tpu_custom_call.1} parent=1 // pred_fallthru
      _
    // Predicated region
    $region26: #{tpu_custom_call.1} parent=1 // pred_check
      _
    $region27: #{tpu_custom_call.1} parent=1 // pred_check_branch
      %36 = sbr.rel (0) target = $region29
    $region28: #{tpu_custom_call.1} parent=1 // pred_region
      _
    $region29: #{tpu_custom_call.1} parent=1 // pred_fallthru
      _
    // Predicated region
    $region30: #{tpu_custom_call.1} parent=1 // pred_check
      _
    $region31: #{tpu_custom_call.1} parent=1 // pred_check_branch
      %38 = sbr.rel (0) target = $region33
    $region32: #{tpu_custom_call.1} parent=1 // pred_region
      _
    $region33: #{tpu_custom_call.1} parent=1 // pred_fallthru
      _
    // Predicated region
    $region34: #{tpu_custom_call.1} parent=1 // pred_check
      _
    $region35: #{tpu_custom_call.1} parent=1 // pred_check_branch
      %40 = sbr.rel (0) target = $region37
    $region36: #{tpu_custom_call.1} parent=1 // pred_region
      _
    $region37: #{tpu_custom_call.1} parent=1 // pred_fallthru
      _
    // Predicated region
    $region38: #{tpu_custom_call.1} parent=1 // pred_check
      _
    $region39: #{tpu_custom_call.1} parent=1 // pred_check_branch
      %42 = sbr.rel (0) target = $region41
    $region40: #{tpu_custom_call.1} parent=1 // pred_region
      _
    $region41: #{tpu_custom_call.1} parent=1 // pred_fallthru
      _
    // Predicated region
    $region42: #{tpu_custom_call.1} parent=1 // pred_check
      _
    $region43: #{tpu_custom_call.1} parent=1 // pred_check_branch
      %44 = sbr.rel (0) target = $region45
    $region44: #{tpu_custom_call.1} parent=1 // pred_region
      _
    $region45: #{tpu_custom_call.1} parent=1 // pred_fallthru
      _
    // Predicated region
    $region46: #{tpu_custom_call.1} parent=1 // pred_check
      _
    $region47: #{tpu_custom_call.1} parent=1 // pred_check_branch
      %46 = sbr.rel (0) target = $region49
    $region48: #{tpu_custom_call.1} parent=1 // pred_region
      _
    $region49: #{tpu_custom_call.1} parent=1 // pred_fallthru
      _
    // Predicated region
    $region50: #{tpu_custom_call.1} parent=1 // pred_check
      _
    $region51: #{tpu_custom_call.1} parent=1 // pred_check_branch
      %48 = sbr.rel (0) target = $region53
    $region52: #{tpu_custom_call.1} parent=1 // pred_region
      _
    $region53: #{tpu_custom_call.1} parent=1 // pred_fallthru
      _
    %v49 = vld [vmem:[%s0] sm:$0x3]
    %v50 = vld [vmem:[%s1] sm:$0xff]
    %v51 = vld [vmem:[%s1 + $0x8] sm:$0xff]
    %v52 = vld [vmem:[%s2] sm:$0x1]
    %v54 = vlaneseq
    %v55 = vshrl.u32 %v54, 7
    %v56 = vsub.s32 0, %v55
    %v57 = vrot.slane %v52, %v56
    %vm59 = vcmask 130048
    %v61 = vsel %vm59, %v49, 0
    %63 = vmatprep.subr.mxu0 0.0
    %64 = vmatpush1.msra.mxu0 %v50
    %65 = vmatprep.subr.mxu0 0.0
    %66 = vmatpush1.msra.mxu0 %v51
    %67 = vmatprep.subr.mxu0 0.0
    %68 = vmatpush1.msra.mxu0 0.0
    %69 = vmatprep.subr.mxu0 0.0
    %70 = vmatpush1.msra.mxu0 0.0
    %71 = vmatprep.subr.mxu0 0.0
    %72 = vmatpush1.msra.mxu0 0.0
    %73 = vmatprep.subr.mxu0 0.0
    %74 = vmatpush1.msra.mxu0 0.0
    %75 = vmatprep.subr.mxu0 0.0
    %76 = vmatpush1.msra.mxu0 0.0
    %77 = vmatprep.subr.mxu0 0.0
    %78 = vmatpush1.msra.mxu0 0.0
    %79 = vmatprep.subr.mxu0 0.0
    %80 = vmatpush1.msra.mxu0 0.0
    %81 = vmatprep.subr.mxu0 0.0
    %82 = vmatpush1.msra.mxu0 0.0
    %83 = vmatprep.subr.mxu0 0.0
    %84 = vmatpush1.msra.mxu0 0.0
    %85 = vmatprep.subr.mxu0 0.0
    %86 = vmatpush1.msra.mxu0 0.0
    %87 = vmatprep.subr.mxu0 0.0
    %88 = vmatpush1.msra.mxu0 0.0
    %89 = vmatprep.subr.mxu0 0.0
    %90 = vmatpush1.msra.mxu0 0.0
    %91 = vmatprep.subr.mxu0 0.0
    %92 = vmatpush1.msra.mxu0 0.0
    %93 = vmatprep.subr.mxu0 0.0
    %94 = vmatpush1.msra.mxu0 0.0
    %95 = vmatprep.subr.mxu0 0.0
    %96 = vmatpush1.msra.mxu0 0.0
    %97 = vmatprep.subr.mxu0 0.0
    %98 = vmatpush1.msra.mxu0 0.0
    %99 = vmatprep.subr.mxu0 0.0
    %100 = vmatpush1.msra.mxu0 0.0
    %101 = vmatprep.subr.mxu0 0.0
    %102 = vmatpush1.msra.mxu0 0.0
    %103 = vmatprep.subr.mxu0 0.0
    %104 = vmatpush1.msra.mxu0 0.0
    %105 = vmatprep.subr.mxu0 0.0
    %106 = vmatpush1.msra.mxu0 0.0
    %107 = vmatprep.subr.mxu0 0.0
    %108 = vmatpush1.msra.mxu0 0.0
    %109 = vmatprep.subr.mxu0 0.0
    %110 = vmatpush1.msra.mxu0 0.0
    %111 = vmatprep.subr.mxu0 0.0
    %112 = vmatpush1.msra.mxu0 0.0
    %113 = vmatprep.subr.mxu0 0.0
    %114 = vmatpush1.msra.mxu0 0.0
    %115 = vmatprep.subr.mxu0 0.0
    %116 = vmatpush1.msra.mxu0 0.0
    %117 = vmatprep.subr.mxu0 0.0
    %118 = vmatpush1.msra.mxu0 0.0
    %119 = vmatprep.subr.mxu0 0.0
    %120 = vmatpush1.msra.mxu0 0.0
    %121 = vmatprep.subr.mxu0 0.0
    %122 = vmatpush1.msra.mxu0 0.0
    %123 = vmatprep.subr.mxu0 0.0
    %124 = vmatpush1.msra.mxu0 0.0
    %125 = vmatprep.subr.mxu0 0.0
    %126 = vmatpush1.msra.mxu0 0.0
    %127 = vmatprep.mubr.f32.mxu0 0.0
    %128 = vmatmul.mubr.f32.gmra.mrb[0].mxu0 %v61
    %v129 = vpop.f32.mrb[0].mxu0
    %v130 = vadd.f32 %v57, %v129
    %v131 = vpop.f32.mrb[0].mxu0
    %132 = vdwg.mxu0
    %v133 = vmax.f32 %v130, 0.0
    %v134 = vld [vmem:[%s3] sm:$0xff]
    %v135 = vld [vmem:[%s3 + $0x8] sm:$0xff]
    %v136 = vld [vmem:[%s3 + $0x10] sm:$0xff]
    %v137 = vld [vmem:[%s3 + $0x18] sm:$0xff]
    %v138 = vld [vmem:[%s3 + $0x20] sm:$0xff]
    %v139 = vld [vmem:[%s3 + $0x28] sm:$0xff]
    %v140 = vld [vmem:[%s3 + $0x30] sm:$0xff]
    %v141 = vld [vmem:[%s3 + $0x38] sm:$0xff]
    %v142 = vld [vmem:[%s3 + $0x40] sm:$0xff]
    %v143 = vld [vmem:[%s3 + $0x48] sm:$0xff]
    %v144 = vld [vmem:[%s3 + $0x50] sm:$0xff]
    %v145 = vld [vmem:[%s3 + $0x58] sm:$0xff]
    %v146 = vld [vmem:[%s3 + $0x60] sm:$0xff]
    %v147 = vld [vmem:[%s3 + $0x68] sm:$0xff]
    %v148 = vld [vmem:[%s3 + $0x70] sm:$0xff]
    %v149 = vld [vmem:[%s3 + $0x78] sm:$0xff]
    %v150 = vld [vmem:[%s4] sm:$0x1]
    %v152 = vlaneseq
    %v153 = vshrl.u32 %v152, 7
    %v154 = vsub.s32 0, %v153
    %v155 = vrot.slane %v150, %v154
    %157 = vmatprep.subr.mxu0 0.0
    %158 = vmatpush1.msra.mxu0 %v134
    %159 = vmatprep.subr.mxu0 0.0
    %160 = vmatpush1.msra.mxu0 %v135
    %161 = vmatprep.subr.mxu0 0.0
    %162 = vmatpush1.msra.mxu0 %v136
    %163 = vmatprep.subr.mxu0 0.0
    %164 = vmatpush1.msra.mxu0 %v137
    %165 = vmatprep.subr.mxu0 0.0
    %166 = vmatpush1.msra.mxu0 %v138
    %167 = vmatprep.subr.mxu0 0.0
    %168 = vmatpush1.msra.mxu0 %v139
    %169 = vmatprep.subr.mxu0 0.0
    %170 = vmatpush1.msra.mxu0 %v140
    %171 = vmatprep.subr.mxu0 0.0
    %172 = vmatpush1.msra.mxu0 %v141
    %173 = vmatprep.subr.mxu0 0.0
    %174 = vmatpush1.msra.mxu0 %v142
    %175 = vmatprep.subr.mxu0 0.0
    %176 = vmatpush1.msra.mxu0 %v143
    %177 = vmatprep.subr.mxu0 0.0
    %178 = vmatpush1.msra.mxu0 %v144
    %179 = vmatprep.subr.mxu0 0.0
    %180 = vmatpush1.msra.mxu0 %v145
    %181 = vmatprep.subr.mxu0 0.0
    %182 = vmatpush1.msra.mxu0 %v146
    %183 = vmatprep.subr.mxu0 0.0
    %184 = vmatpush1.msra.mxu0 %v147
    %185 = vmatprep.subr.mxu0 0.0
    %186 = vmatpush1.msra.mxu0 %v148
    %187 = vmatprep.subr.mxu0 0.0
    %188 = vmatpush1.msra.mxu0 %v149
    %189 = vmatprep.subr.mxu0 0.0
    %190 = vmatpush1.msra.mxu0 0.0
    %191 = vmatprep.subr.mxu0 0.0
    %192 = vmatpush1.msra.mxu0 0.0
    %193 = vmatprep.subr.mxu0 0.0
    %194 = vmatpush1.msra.mxu0 0.0
    %195 = vmatprep.subr.mxu0 0.0
    %196 = vmatpush1.msra.mxu0 0.0
    %197 = vmatprep.subr.mxu0 0.0
    %198 = vmatpush1.msra.mxu0 0.0
    %199 = vmatprep.subr.mxu0 0.0
    %200 = vmatpush1.msra.mxu0 0.0
    %201 = vmatprep.subr.mxu0 0.0
    %202 = vmatpush1.msra.mxu0 0.0
    %203 = vmatprep.subr.mxu0 0.0
    %204 = vmatpush1.msra.mxu0 0.0
    %205 = vmatprep.subr.mxu0 0.0
    %206 = vmatpush1.msra.mxu0 0.0
    %207 = vmatprep.subr.mxu0 0.0
    %208 = vmatpush1.msra.mxu0 0.0
    %209 = vmatprep.subr.mxu0 0.0
    %210 = vmatpush1.msra.mxu0 0.0
    %211 = vmatprep.subr.mxu0 0.0
    %212 = vmatpush1.msra.mxu0 0.0
    %213 = vmatprep.subr.mxu0 0.0
    %214 = vmatpush1.msra.mxu0 0.0
    %215 = vmatprep.subr.mxu0 0.0
    %216 = vmatpush1.msra.mxu0 0.0
    %217 = vmatprep.subr.mxu0 0.0
    %218 = vmatpush1.msra.mxu0 0.0
    %219 = vmatprep.subr.mxu0 0.0
    %220 = vmatpush1.msra.mxu0 0.0
    %221 = vmatprep.mubr.f32.mxu0 0.0
    %222 = vmatmul.mubr.f32.gmra.mrb[0].mxu0 %v133
    %v223 = vpop.f32.mrb[0].mxu0
    %v224 = vadd.f32 %v155, %v223
    %v225 = vpop.f32.mrb[0].mxu0
    %226 = vdwg.mxu0
    %v227 = vmax.f32 %v224, 0.0
    %v228 = vld [vmem:[%s5] sm:$0xff]
    %v229 = vld [vmem:[%s5 + $0x8] sm:$0xff]
    %v230 = vld [vmem:[%s5 + $0x10] sm:$0xff]
    %v231 = vld [vmem:[%s5 + $0x18] sm:$0xff]
    %v232 = vld [vmem:[%s5 + $0x20] sm:$0xff]
    %v233 = vld [vmem:[%s5 + $0x28] sm:$0xff]
    %v234 = vld [vmem:[%s5 + $0x30] sm:$0xff]
    %v235 = vld [vmem:[%s5 + $0x38] sm:$0xff]
    %v236 = vld [vmem:[%s6] sm:$0x1]
    %v238 = vlaneseq
    %v239 = vshrl.u32 %v238, 7
    %v240 = vsub.s32 0, %v239
    %v241 = vrot.slane %v236, %v240
    %vm243 = vcmask 523264
    %v245 = vsel %vm243, %v227, 0
    %247 = vmatprep.subr.mxu0 0.0
    %248 = vmatpush1.msra.mxu0 %v228
    %249 = vmatprep.subr.mxu0 0.0
    %250 = vmatpush1.msra.mxu0 %v229
    %251 = vmatprep.subr.mxu0 0.0
    %252 = vmatpush1.msra.mxu0 %v230
    %253 = vmatprep.subr.mxu0 0.0
    %254 = vmatpush1.msra.mxu0 %v231
    %255 = vmatprep.subr.mxu0 0.0
    %256 = vmatpush1.msra.mxu0 %v232
    %257 = vmatprep.subr.mxu0 0.0
    %258 = vmatpush1.msra.mxu0 %v233
    %259 = vmatprep.subr.mxu0 0.0
    %260 = vmatpush1.msra.mxu0 %v234
    %261 = vmatprep.subr.mxu0 0.0
    %262 = vmatpush1.msra.mxu0 %v235
    %263 = vmatprep.subr.mxu0 0.0
    %264 = vmatpush1.msra.mxu0 0.0
    %265 = vmatprep.subr.mxu0 0.0
    %266 = vmatpush1.msra.mxu0 0.0
    %267 = vmatprep.subr.mxu0 0.0
    %268 = vmatpush1.msra.mxu0 0.0
    %269 = vmatprep.subr.mxu0 0.0
    %270 = vmatpush1.msra.mxu0 0.0
    %271 = vmatprep.subr.mxu0 0.0
    %272 = vmatpush1.msra.mxu0 0.0
    %273 = vmatprep.subr.mxu0 0.0
    %274 = vmatpush1.msra.mxu0 0.0
    %275 = vmatprep.subr.mxu0 0.0
    %276 = vmatpush1.msra.mxu0 0.0
    %277 = vmatprep.subr.mxu0 0.0
    %278 = vmatpush1.msra.mxu0 0.0
    %279 = vmatprep.subr.mxu0 0.0
    %280 = vmatpush1.msra.mxu0 0.0
    %281 = vmatprep.subr.mxu0 0.0
    %282 = vmatpush1.msra.mxu0 0.0
    %283 = vmatprep.subr.mxu0 0.0
    %284 = vmatpush1.msra.mxu0 0.0
    %285 = vmatprep.subr.mxu0 0.0
    %286 = vmatpush1.msra.mxu0 0.0
    %287 = vmatprep.subr.mxu0 0.0
    %288 = vmatpush1.msra.mxu0 0.0
    %289 = vmatprep.subr.mxu0 0.0
    %290 = vmatpush1.msra.mxu0 0.0
    %291 = vmatprep.subr.mxu0 0.0
    %292 = vmatpush1.msra.mxu0 0.0
    %293 = vmatprep.subr.mxu0 0.0
    %294 = vmatpush1.msra.mxu0 0.0
    %295 = vmatprep.subr.mxu0 0.0
    %296 = vmatpush1.msra.mxu0 0.0
    %297 = vmatprep.subr.mxu0 0.0
    %298 = vmatpush1.msra.mxu0 0.0
    %299 = vmatprep.subr.mxu0 0.0
    %300 = vmatpush1.msra.mxu0 0.0
    %301 = vmatprep.subr.mxu0 0.0
    %302 = vmatpush1.msra.mxu0 0.0
    %303 = vmatprep.subr.mxu0 0.0
    %304 = vmatpush1.msra.mxu0 0.0
    %305 = vmatprep.subr.mxu0 0.0
    %306 = vmatpush1.msra.mxu0 0.0
    %307 = vmatprep.subr.mxu0 0.0
    %308 = vmatpush1.msra.mxu0 0.0
    %309 = vmatprep.subr.mxu0 0.0
    %310 = vmatpush1.msra.mxu0 0.0
    %311 = vmatprep.mubr.f32.mxu0 0.0
    %312 = vmatmul.mubr.f32.gmra.mrb[0].mxu0 %v245
    %v313 = vpop.f32.mrb[0].mxu0
    %v314 = vadd.f32 %v241, %v313
    %v315 = vpop.f32.mrb[0].mxu0
    %316 = vdwg.mxu0
    %v317 = vmax.f32 %v314, 0.0
    %v318 = vld [vmem:[%s7] sm:$0xff]
    %v319 = vld [vmem:[%s7 + $0x8] sm:$0xff]
    %v320 = vld [vmem:[%s7 + $0x10] sm:$0xff]
    %v321 = vld [vmem:[%s7 + $0x18] sm:$0xff]
    %v322 = vld [vmem:[%s8] sm:$0x1]
    %v324 = vlaneseq
    %v325 = vshrl.u32 %v324, 7
    %v326 = vsub.s32 0, %v325
    %v327 = vrot.slane %v322, %v326
    %vm329 = vcmask 261120
    %v331 = vsel %vm329, %v317, 0
    %333 = vmatprep.subr.mxu0 0.0
    %334 = vmatpush1.msra.mxu0 %v318
    %335 = vmatprep.subr.mxu0 0.0
    %336 = vmatpush1.msra.mxu0 %v319
    %337 = vmatprep.subr.mxu0 0.0
    %338 = vmatpush1.msra.mxu0 %v320
    %339 = vmatprep.subr.mxu0 0.0
    %340 = vmatpush1.msra.mxu0 %v321
    %341 = vmatprep.subr.mxu0 0.0
    %342 = vmatpush1.msra.mxu0 0.0
    %343 = vmatprep.subr.mxu0 0.0
    %344 = vmatpush1.msra.mxu0 0.0
    %345 = vmatprep.subr.mxu0 0.0
    %346 = vmatpush1.msra.mxu0 0.0
    %347 = vmatprep.subr.mxu0 0.0
    %348 = vmatpush1.msra.mxu0 0.0
    %349 = vmatprep.subr.mxu0 0.0
    %350 = vmatpush1.msra.mxu0 0.0
    %351 = vmatprep.subr.mxu0 0.0
    %352 = vmatpush1.msra.mxu0 0.0
    %353 = vmatprep.subr.mxu0 0.0
    %354 = vmatpush1.msra.mxu0 0.0
    %355 = vmatprep.subr.mxu0 0.0
    %356 = vmatpush1.msra.mxu0 0.0
    %357 = vmatprep.subr.mxu0 0.0
    %358 = vmatpush1.msra.mxu0 0.0
    %359 = vmatprep.subr.mxu0 0.0
    %360 = vmatpush1.msra.mxu0 0.0
    %361 = vmatprep.subr.mxu0 0.0
    %362 = vmatpush1.msra.mxu0 0.0
    %363 = vmatprep.subr.mxu0 0.0
    %364 = vmatpush1.msra.mxu0 0.0
    %365 = vmatprep.subr.mxu0 0.0
    %366 = vmatpush1.msra.mxu0 0.0
    %367 = vmatprep.subr.mxu0 0.0
    %368 = vmatpush1.msra.mxu0 0.0
    %369 = vmatprep.subr.mxu0 0.0
    %370 = vmatpush1.msra.mxu0 0.0
    %371 = vmatprep.subr.mxu0 0.0
    %372 = vmatpush1.msra.mxu0 0.0
    %373 = vmatprep.subr.mxu0 0.0
    %374 = vmatpush1.msra.mxu0 0.0
    %375 = vmatprep.subr.mxu0 0.0
    %376 = vmatpush1.msra.mxu0 0.0
    %377 = vmatprep.subr.mxu0 0.0
    %378 = vmatpush1.msra.mxu0 0.0
    %379 = vmatprep.subr.mxu0 0.0
    %380 = vmatpush1.msra.mxu0 0.0
    %381 = vmatprep.subr.mxu0 0.0
    %382 = vmatpush1.msra.mxu0 0.0
    %383 = vmatprep.subr.mxu0 0.0
    %384 = vmatpush1.msra.mxu0 0.0
    %385 = vmatprep.subr.mxu0 0.0
    %386 = vmatpush1.msra.mxu0 0.0
    %387 = vmatprep.subr.mxu0 0.0
    %388 = vmatpush1.msra.mxu0 0.0
    %389 = vmatprep.subr.mxu0 0.0
    %390 = vmatpush1.msra.mxu0 0.0
    %391 = vmatprep.subr.mxu0 0.0
    %392 = vmatpush1.msra.mxu0 0.0
    %393 = vmatprep.subr.mxu0 0.0
    %394 = vmatpush1.msra.mxu0 0.0
    %395 = vmatprep.subr.mxu0 0.0
    %396 = vmatpush1.msra.mxu0 0.0
    %397 = vmatprep.mubr.f32.mxu0 0.0
    %398 = vmatmul.mubr.f32.gmra.mrb[0].mxu0 %v331
    %v399 = vpop.f32.mrb[0].mxu0
    %v400 = vadd.f32 %v327, %v399
    %v401 = vpop.f32.mrb[0].mxu0
    %402 = vdwg.mxu0
    %v403 = vsub.f32 0.0, %v400
    %v404 = vmul.f32 %v403, 1.442695
    %v405 = vpow.pop %v404
    %v406 = vadd.f32 %v405, 1.0
    %v407 = vrcp.pop %v406
    %v408 = vmul.f32 1.0, %v407
    %vm409 = vcmask 9216
    %410 = vst.msk [vmem:[#allocation3] sm:$0x3] %vm409, %v408
    %v411 = vld [vmem:[%s9] sm:$0xff]
    %v412 = vld [vmem:[%s9 + $0x8] sm:$0xff]
    %v413 = vld [vmem:[%s9 + $0x10] sm:$0xff]
    %v414 = vld [vmem:[%s9 + $0x18] sm:$0xff]
    %v415 = vld [vmem:[%s9 + $0x20] sm:$0xff]
    %v416 = vld [vmem:[%s9 + $0x28] sm:$0xff]
    %v417 = vld [vmem:[%s9 + $0x30] sm:$0xff]
    %v418 = vld [vmem:[%s9 + $0x38] sm:$0xff]
    %v419 = vld [vmem:[%s9 + $0x40] sm:$0xff]
    %v420 = vld [vmem:[%s9 + $0x48] sm:$0xff]
    %v421 = vld [vmem:[%s9 + $0x50] sm:$0xff]
    %v422 = vld [vmem:[%s9 + $0x58] sm:$0xff]
    %v423 = vld [vmem:[%s9 + $0x60] sm:$0xff]
    %v424 = vld [vmem:[%s9 + $0x68] sm:$0xff]
    %v425 = vld [vmem:[%s9 + $0x70] sm:$0xff]
    %v426 = vld [vmem:[%s9 + $0x78] sm:$0xff]
    %v427 = vld [vmem:[%s10] sm:$0x1]
    %v429 = vlaneseq
    %v430 = vshrl.u32 %v429, 7
    %v431 = vsub.s32 0, %v430
    %v432 = vrot.slane %v427, %v431
    %434 = vmatprep.subr.mxu0 0.0
    %435 = vmatpush1.msra.mxu0 %v411
    %436 = vmatprep.subr.mxu0 0.0
    %437 = vmatpush1.msra.mxu0 %v412
    %438 = vmatprep.subr.mxu0 0.0
    %439 = vmatpush1.msra.mxu0 %v413
    %440 = vmatprep.subr.mxu0 0.0
    %441 = vmatpush1.msra.mxu0 %v414
    %442 = vmatprep.subr.mxu0 0.0
    %443 = vmatpush1.msra.mxu0 %v415
    %444 = vmatprep.subr.mxu0 0.0
    %445 = vmatpush1.msra.mxu0 %v416
    %446 = vmatprep.subr.mxu0 0.0
    %447 = vmatpush1.msra.mxu0 %v417
    %448 = vmatprep.subr.mxu0 0.0
    %449 = vmatpush1.msra.mxu0 %v418
    %450 = vmatprep.subr.mxu0 0.0
    %451 = vmatpush1.msra.mxu0 %v419
    %452 = vmatprep.subr.mxu0 0.0
    %453 = vmatpush1.msra.mxu0 %v420
    %454 = vmatprep.subr.mxu0 0.0
    %455 = vmatpush1.msra.mxu0 %v421
    %456 = vmatprep.subr.mxu0 0.0
    %457 = vmatpush1.msra.mxu0 %v422
    %458 = vmatprep.subr.mxu0 0.0
    %459 = vmatpush1.msra.mxu0 %v423
    %460 = vmatprep.subr.mxu0 0.0
    %461 = vmatpush1.msra.mxu0 %v424
    %462 = vmatprep.subr.mxu0 0.0
    %463 = vmatpush1.msra.mxu0 %v425
    %464 = vmatprep.subr.mxu0 0.0
    %465 = vmatpush1.msra.mxu0 %v426
    %466 = vmatprep.subr.mxu0 0.0
    %467 = vmatpush1.msra.mxu0 0.0
    %468 = vmatprep.subr.mxu0 0.0
    %469 = vmatpush1.msra.mxu0 0.0
    %470 = vmatprep.subr.mxu0 0.0
    %471 = vmatpush1.msra.mxu0 0.0
    %472 = vmatprep.subr.mxu0 0.0
    %473 = vmatpush1.msra.mxu0 0.0
    %474 = vmatprep.subr.mxu0 0.0
    %475 = vmatpush1.msra.mxu0 0.0
    %476 = vmatprep.subr.mxu0 0.0
    %477 = vmatpush1.msra.mxu0 0.0
    %478 = vmatprep.subr.mxu0 0.0
    %479 = vmatpush1.msra.mxu0 0.0
    %480 = vmatprep.subr.mxu0 0.0
    %481 = vmatpush1.msra.mxu0 0.0
    %482 = vmatprep.subr.mxu0 0.0
    %483 = vmatpush1.msra.mxu0 0.0
    %484 = vmatprep.subr.mxu0 0.0
    %485 = vmatpush1.msra.mxu0 0.0
    %486 = vmatprep.subr.mxu0 0.0
    %487 = vmatpush1.msra.mxu0 0.0
    %488 = vmatprep.subr.mxu0 0.0
    %489 = vmatpush1.msra.mxu0 0.0
    %490 = vmatprep.subr.mxu0 0.0
    %491 = vmatpush1.msra.mxu0 0.0
    %492 = vmatprep.subr.mxu0 0.0
    %493 = vmatpush1.msra.mxu0 0.0
    %494 = vmatprep.subr.mxu0 0.0
    %495 = vmatpush1.msra.mxu0 0.0
    %496 = vmatprep.subr.mxu0 0.0
    %497 = vmatpush1.msra.mxu0 0.0
    %498 = vmatprep.mubr.f32.mxu0 0.0
    %499 = vmatmul.mubr.f32.gmra.mrb[0].mxu0 %v133
    %v500 = vpop.f32.mrb[0].mxu0
    %v501 = vadd.f32 %v432, %v500
    %v502 = vpop.f32.mrb[0].mxu0
    %503 = vdwg.mxu0
    %v504 = vmax.f32 %v501, 0.0
    %v505 = vld [vmem:[%s11] sm:$0xff]
    %v506 = vld [vmem:[%s11 + $0x8] sm:$0xff]
    %v507 = vld [vmem:[%s11 + $0x10] sm:$0xff]
    %v508 = vld [vmem:[%s11 + $0x18] sm:$0xff]
    %v509 = vld [vmem:[#allocation2] sm:$0x1]
    %v511 = vlaneseq
    %v512 = vshrl.u32 %v511, 7
    %v513 = vsub.s32 0, %v512
    %v514 = vrot.slane %v509, %v513
    %v517 = vsel %vm329, %v504, 0
    %519 = vmatprep.subr.mxu0 0.0
    %520 = vmatpush1.msra.mxu0 %v505
    %521 = vmatprep.subr.mxu0 0.0
    %522 = vmatpush1.msra.mxu0 %v506
    %523 = vmatprep.subr.mxu0 0.0
    %524 = vmatpush1.msra.mxu0 %v507
    %525 = vmatprep.subr.mxu0 0.0
    %526 = vmatpush1.msra.mxu0 %v508
    %527 = vmatprep.subr.mxu0 0.0
    %528 = vmatpush1.msra.mxu0 0.0
    %529 = vmatprep.subr.mxu0 0.0
    %530 = vmatpush1.msra.mxu0 0.0
    %531 = vmatprep.subr.mxu0 0.0
    %532 = vmatpush1.msra.mxu0 0.0
    %533 = vmatprep.subr.mxu0 0.0
    %534 = vmatpush1.msra.mxu0 0.0
    %535 = vmatprep.subr.mxu0 0.0
    %536 = vmatpush1.msra.mxu0 0.0
    %537 = vmatprep.subr.mxu0 0.0
    %538 = vmatpush1.msra.mxu0 0.0
    %539 = vmatprep.subr.mxu0 0.0
    %540 = vmatpush1.msra.mxu0 0.0
    %541 = vmatprep.subr.mxu0 0.0
    %542 = vmatpush1.msra.mxu0 0.0
    %543 = vmatprep.subr.mxu0 0.0
    %544 = vmatpush1.msra.mxu0 0.0
    %545 = vmatprep.subr.mxu0 0.0
    %546 = vmatpush1.msra.mxu0 0.0
    %547 = vmatprep.subr.mxu0 0.0
    %548 = vmatpush1.msra.mxu0 0.0
    %549 = vmatprep.subr.mxu0 0.0
    %550 = vmatpush1.msra.mxu0 0.0
    %551 = vmatprep.subr.mxu0 0.0
    %552 = vmatpush1.msra.mxu0 0.0
    %553 = vmatprep.subr.mxu0 0.0
    %554 = vmatpush1.msra.mxu0 0.0
    %555 = vmatprep.subr.mxu0 0.0
    %556 = vmatpush1.msra.mxu0 0.0
    %557 = vmatprep.subr.mxu0 0.0
    %558 = vmatpush1.msra.mxu0 0.0
    %559 = vmatprep.subr.mxu0 0.0
    %560 = vmatpush1.msra.mxu0 0.0
    %561 = vmatprep.subr.mxu0 0.0
    %562 = vmatpush1.msra.mxu0 0.0
    %563 = vmatprep.subr.mxu0 0.0
    %564 = vmatpush1.msra.mxu0 0.0
    %565 = vmatprep.subr.mxu0 0.0
    %566 = vmatpush1.msra.mxu0 0.0
    %567 = vmatprep.subr.mxu0 0.0
    %568 = vmatpush1.msra.mxu0 0.0
    %569 = vmatprep.subr.mxu0 0.0
    %570 = vmatpush1.msra.mxu0 0.0
    %571 = vmatprep.subr.mxu0 0.0
    %572 = vmatpush1.msra.mxu0 0.0
    %573 = vmatprep.subr.mxu0 0.0
    %574 = vmatpush1.msra.mxu0 0.0
    %575 = vmatprep.subr.mxu0 0.0
    %576 = vmatpush1.msra.mxu0 0.0
    %577 = vmatprep.subr.mxu0 0.0
    %578 = vmatpush1.msra.mxu0 0.0
    %579 = vmatprep.subr.mxu0 0.0
    %580 = vmatpush1.msra.mxu0 0.0
    %581 = vmatprep.subr.mxu0 0.0
    %582 = vmatpush1.msra.mxu0 0.0
    %583 = vmatprep.mubr.f32.mxu0 0.0
    %584 = vmatmul.mubr.f32.gmra.mrb[0].mxu0 %v517
    %v585 = vpop.f32.mrb[0].mxu0
    %v586 = vadd.f32 %v514, %v585
    %v587 = vpop.f32.mrb[0].mxu0
    %588 = vdwg.mxu0
    %vm589 = vcmask 1024
    %590 = vst.msk [vmem:[%s14] sm:$0x3] %vm589, %v586
    // Predicated region
    $region54: #{tpu_custom_call.1} parent=1 // pred_check
      _
    $region55: #{tpu_custom_call.1} parent=1 // pred_check_branch
      %592 = sbr.rel (0) target = $region57
    $region56: #{tpu_custom_call.1} parent=1 // pred_region
      %s594 = ssub.s32 32, 32
      %595 = vsyncadd [#allocation4], %s594
      %s597 = sshll.u32 [#allocation3], 4
      %s598 = int_to_ptr.vmem [resolvable:$true] %s597
      %600 = dma.vmem_to_hbm [thread:$0]  %s598, 32, %s13, [#allocation4]
    $region57: #{tpu_custom_call.1} parent=1 // pred_fallthru
      _
    // Predicated region
    $region58: #{tpu_custom_call.1} parent=1 // pred_check
      _
    $region59: #{tpu_custom_call.1} parent=1 // pred_check_branch
      %602 = sbr.rel (0) target = $region61
    $region60: #{tpu_custom_call.1} parent=1 // pred_region
      _
    $region61: #{tpu_custom_call.1} parent=1 // pred_fallthru
      _
    // Predicated region
    $region62: #{tpu_custom_call.1} parent=1 // pred_check
      _
    $region63: #{tpu_custom_call.1} parent=1 // pred_check_branch
      %604 = sbr.rel (0) target = $region65
    $region64: #{tpu_custom_call.1} parent=1 // pred_region
      %605 = dma.done [#allocation4], 32
    $region65: #{tpu_custom_call.1} parent=1 // pred_fallthru
      _
    // Predicated region
    $region66: #{tpu_custom_call.1} parent=1 // pred_check
      _
    $region67: #{tpu_custom_call.1} parent=1 // pred_check_branch
      %607 = sbr.rel (0) target = $region69
    $region68: #{tpu_custom_call.1} parent=1 // pred_region
      _
    $region69: #{tpu_custom_call.1} parent=1 // pred_fallthru
      _
    %608 = vsyncpa [#allocation4], 1

</llo_original>
